<compile_context>
chip_gen: v6e
topology: v6e:2x2x1
jax: 0.10.0
libtpu: 0.0.40
codegen_flags: <defaults>
</compile_context>

<pallas_src>
import math
import numpy as np
import jax
import jax.numpy as jnp
from jax.experimental import pallas as pl
from jax.experimental.pallas import tpu as pltpu

LANE = 128
EPS = 1e-5


def _round_up(x, m):
    return ((x + m - 1) // m) * m


def _tiling(n, tile1_want=1024, sub=4):
    """Pick row tiles: pass-2 tile = sub * pass-1 tile, both multiples of 16
    sublanes, sharing a single padded row count n_pad."""
    tile2_want = tile1_want * sub
    n_tiles2 = max(1, math.ceil(n / tile2_want))
    tile2 = _round_up(math.ceil(n / n_tiles2), 16 * sub)   # multiple of 16*sub
    tile1 = tile2 // sub                                   # multiple of 16
    n_pad = n_tiles2 * tile2
    return tile1, tile2, n_pad


def _vmem_limit(step_bytes, headroom=6 << 20, floor=16 << 20, cap=56 << 20):
    """Double-buffered pipeline buffers + compiler scratch headroom; capped below
    v7x's 64 MiB-per-TC physical VMEM (also fine vs v5e/v6e scoped defaults)."""
    return int(min(max(2 * step_bytes + headroom, floor), cap))


# ---------------------------------------------------------------------------
# Pass 1: one MXU-shaped [tile, K*Cin] @ [K*Cin, Cout_pad] dot per row tile,
# bf16 inputs, f32 accumulation; emits bf16 y tile + one merged stats block
# (row 0 = sum, row 1 = sum of squares) taken from the f32 accumulator.
# ---------------------------------------------------------------------------
def conv_stats_kernel(g_ref, w_ref, y_ref, stats_ref):
    y = jnp.dot(g_ref[...], w_ref[...], preferred_element_type=jnp.float32)
    y_ref[...] = y.astype(y_ref.dtype)                       # bf16 intermediate
    s = jnp.sum(y, axis=0, keepdims=True)                    # (1, Cout_pad)
    q = jnp.sum(y * y, axis=0, keepdims=True)                # (1, Cout_pad)
    stats_ref[...] = jnp.concatenate([s, q], axis=0)[None]   # (1, 2, Cout_pad)


# ---------------------------------------------------------------------------
# Pass 2: streaming fused affine BatchNorm + ReLU over (larger) row tiles.
# ---------------------------------------------------------------------------
def bn_relu_kernel(y_ref, scale_ref, shift_ref, o_ref):
    y = y_ref[...].astype(jnp.float32)
    o_ref[...] = jnp.maximum(y * scale_ref[...] + shift_ref[...], 0.0).astype(
        o_ref.dtype)


def sparse_deconv_bn_relu(x, idx_nk, weight, gamma, beta, *,
                          tile_n=1024, eps=EPS, slice_output=True):
    """x: [N, Cin] f32 voxel features; idx_nk: [N, K] int32 kernel map
    (missing neighbour == N, the appended zero-row sentinel);
    weight: [K, Cin, Cout]; gamma/beta: [Cout].

    Returns [N, Cout] f32 if slice_output, else the padded [n_pad, Cout_pad]
    slab whose valid region is [:N, :Cout] (slice lazily in the consumer)."""
    N, Cin = x.shape
    K = idx_nk.shape[1]
    Cout = weight.shape[2]
    KC = K * Cin
    cout_pad = _round_up(Cout, LANE)
    tile1, tile2, n_pad = _tiling(N, tile_n)
    n_tiles1 = n_pad // tile1
    n_tiles2 = n_pad // tile2

    # ---- glue (XLA): matmul-ready im2col LHS, bf16, no mask multiply ----------
    # TODO(synk): move this gather in-kernel (scalar-prefetched idx + row-gather)
    # to remove the K*Cin-bytes-per-row HBM expansion.
    x_pad = jnp.concatenate(
        [x, jnp.zeros((1, Cin), x.dtype)], axis=0
    ).astype(jnp.bfloat16)                         # zero row = missing neighbour
    g = x_pad[idx_nk].reshape(N, KC)               # [N, K*Cin] bf16
    g = jnp.pad(g, ((0, n_pad - N), (0, 0)))       # padded rows -> y == 0 exactly

    w2 = weight.reshape(KC, Cout).astype(jnp.bfloat16)
    w2 = jnp.pad(w2, ((0, 0), (0, cout_pad - Cout)))        # lane-dense Cout

    # ---- pass 1: conv + partial BN statistics --------------------------------
    step1 = (tile1 * KC * 2            # g tile (bf16)
             + KC * cout_pad * 2       # resident weights (bf16)
             + tile1 * cout_pad * 2    # y tile (bf16)
             + 2 * cout_pad * 4)       # merged stats block (f32)
    cparams1 = pltpu.CompilerParams(
        dimension_semantics=("parallel",),
        vmem_limit_bytes=_vmem_limit(step1),
    )

    y, stats = pl.pallas_call(
        conv_stats_kernel,
        out_shape=(
            jax.ShapeDtypeStruct((n_pad, cout_pad), jnp.bfloat16),
            jax.ShapeDtypeStruct((n_tiles1, 2, cout_pad), jnp.float32),
        ),
        grid_spec=pltpu.PrefetchScalarGridSpec(
            num_scalar_prefetch=0,
            grid=(n_tiles1,),
            in_specs=[
                pl.BlockSpec((tile1, KC), lambda i: (i, 0)),        # LHS row tile
                pl.BlockSpec((KC, cout_pad), lambda i: (0, 0)),     # resident W
            ],
            out_specs=[
                pl.BlockSpec((tile1, cout_pad), lambda i: (i, 0)),  # y tile (bf16)
                pl.BlockSpec((1, 2, cout_pad), lambda i: (i, 0, 0)),  # sum/ssq
            ],
        ),
        compiler_params=cparams1,
    )(g, w2)

    # ---- finalize BN stats (tiny reduction, plain JAX) ------------------------
    total = jnp.sum(stats[:, 0, :], axis=0)
    total_sq = jnp.sum(stats[:, 1, :], axis=0)
    mean = total / N                               # true N: padded rows add 0
    var = jnp.maximum(total_sq / N - mean * mean, 0.0)   # guard f32 cancellation
    inv_std = jax.lax.rsqrt(var + eps)
    gamma_p = jnp.pad(gamma.astype(jnp.float32), (0, cout_pad - Cout))
    beta_p = jnp.pad(beta.astype(jnp.float32), (0, cout_pad - Cout))
    scale = (gamma_p * inv_std).reshape(1, cout_pad)      # padded cols: 0
    shift = (beta_p - mean * gamma_p * inv_std).reshape(1, cout_pad)  # padded: 0

    # ---- pass 2: fused BN + ReLU over larger streaming tiles ------------------
    step2 = (tile2 * cout_pad * 2      # y tile (bf16)
             + tile2 * cout_pad * 4    # out tile (f32)
             + 2 * cout_pad * 4)       # scale/shift
    cparams2 = pltpu.CompilerParams(
        dimension_semantics=("parallel",),
        vmem_limit_bytes=_vmem_limit(step2),
    )

    out = pl.pallas_call(
        bn_relu_kernel,
        out_shape=jax.ShapeDtypeStruct((n_pad, cout_pad), jnp.float32),
        grid_spec=pltpu.PrefetchScalarGridSpec(
            num_scalar_prefetch=0,
            grid=(n_tiles2,),
            in_specs=[
                pl.BlockSpec((tile2, cout_pad), lambda i: (i, 0)),
                pl.BlockSpec((1, cout_pad), lambda i: (0, 0)),      # resident scale
                pl.BlockSpec((1, cout_pad), lambda i: (0, 0)),      # resident shift
            ],
            out_specs=pl.BlockSpec((tile2, cout_pad), lambda i: (i, 0)),
        ),
        compiler_params=cparams2,
    )(y, scale, shift)

    if slice_output:
        return out[:N, :Cout]
    return out


# ---------------------------------------------------------------------------
# Host-side helpers (kernel map construction + pure-JAX reference)
# ---------------------------------------------------------------------------
def build_kernel_map(coords_np, ks=3):
    """idx[j, k] = input voxel whose coords equal coords[j] - offset[k];
    missing neighbours get the sentinel N (the appended zero row)."""
    N = coords_np.shape[0]
    lut = {tuple(c): i for i, c in enumerate(coords_np)}
    r = ks // 2
    offsets = [(dx, dy, dz)
               for dx in range(-r, r + 1)
               for dy in range(-r, r + 1)
               for dz in range(-r, r + 1)]
    K = len(offsets)
    idx = np.full((N, K), N, dtype=np.int32)
    for k, off in enumerate(offsets):
        for j in range(N):
            src = (int(coords_np[j, 0]) - off[0],
                   int(coords_np[j, 1]) - off[1],
                   int(coords_np[j, 2]) - off[2])
            i = lut.get(src)
            if i is not None:
                idx[j, k] = i
    return idx


def reference(x, idx_nk, weight, gamma, beta, eps=EPS):
    N, Cin = x.shape
    x_pad = jnp.concatenate([x, jnp.zeros((1, Cin), x.dtype)], axis=0)
    g = x_pad[idx_nk]                                  # [N, K, Cin]
    # same mixed-precision policy as the kernel: bf16 matmul inputs, f32 accumulate
    y = jnp.einsum('nkc,kcd->nd',
                   g.astype(jnp.bfloat16), weight.astype(jnp.bfloat16),
                   preferred_element_type=jnp.float32)
    mean = jnp.mean(y, axis=0, keepdims=True)
    var = jnp.mean((y - mean) ** 2, axis=0, keepdims=True)
    y_hat = (y - mean) * jax.lax.rsqrt(var + eps)
    return jnp.maximum(y_hat * gamma[None, :] + beta[None, :], 0.0)


if __name__ == "__main__":
    N, Cin, Cout, ks = 200, 16, 32, 3
    K = ks ** 3
    grid = 6  # 6^3 = 216 candidate voxel cells >= N

    key = jax.random.PRNGKey(0)
    k_coord, k_x, k_w, k_g, k_b = jax.random.split(key, 5)

    # deterministic set of N unique voxel coordinates
    flat = jax.random.permutation(k_coord, grid ** 3)[:N]
    flat_np = np.asarray(flat)
    coords_np = np.stack([flat_np // (grid * grid),
                          (flat_np // grid) % grid,
                          flat_np % grid], axis=1).astype(np.int32)

    idx_np = build_kernel_map(coords_np, ks)

    x = jax.random.normal(k_x, (N, Cin), dtype=jnp.float32)
    weight = jax.random.normal(k_w, (K, Cin, Cout), dtype=jnp.float32) * 0.1
    gamma = 1.0 + 0.1 * jax.random.normal(k_g, (Cout,), dtype=jnp.float32)
    beta = 0.1 * jax.random.normal(k_b, (Cout,), dtype=jnp.float32)

    idx = jnp.asarray(idx_np)

    # padded slab out of the kernels; slice lazily (zero-copy numpy view) here
    out_pad = jax.block_until_ready(
        sparse_deconv_bn_relu(x, idx, weight, gamma, beta,
                              tile_n=1024, slice_output=False))
    out = np.asarray(out_pad)[:N, :Cout]

    ref = np.asarray(jax.block_until_ready(
        reference(x, idx, weight, gamma, beta)))

    np.testing.assert_allclose(out, ref, rtol=1e-2, atol=1e-2)
    print("KERNEL_OK")
</pallas_src>

<mosaic_0001>
module attributes {stable_mosaic.version = 11 : i64} {
  func.func @conv_stats_kernel(%arg0: i32, %arg1: memref<64x432xbf16, #tpu.memory_space<vmem>>, %arg2: memref<432x128xbf16, #tpu.memory_space<vmem>>, %arg3: memref<64x128xbf16, #tpu.memory_space<vmem>>, %arg4: memref<1x2x128xf32, #tpu.memory_space<vmem>>) attributes {dimension_semantics = [#tpu.dimension_semantics<parallel>], iteration_bounds = array<i64: 4>, scalar_prefetch = 0 : i64, scratch_operands = 0 : i64, tpu.core_type = #tpu.core_type<tc>, window_params = [{transform_indices = @transform_0, window_bounds = array<i64: 64, 432>}, {pipeline_mode = #tpu.pipeline_mode<synchronous>, transform_indices = @transform_1, window_bounds = array<i64: 432, 128>}, {transform_indices = @transform_2, window_bounds = array<i64: 64, 128>}, {transform_indices = @transform_3, window_bounds = array<i64: 1, 2, 128>}]} {
    %c0 = arith.constant 0 : index
    %c0_0 = arith.constant 0 : index
    %0 = vector.load %arg1[%c0, %c0_0] : memref<64x432xbf16, #tpu.memory_space<vmem>>, vector<64x432xbf16>
    %c0_1 = arith.constant 0 : index
    %c0_2 = arith.constant 0 : index
    %1 = vector.load %arg2[%c0_1, %c0_2] : memref<432x128xbf16, #tpu.memory_space<vmem>>, vector<432x128xbf16>
    %cst = arith.constant dense<0.000000e+00> : vector<64x128xf32>
    %2 = tpu.matmul %0, %1, %cst {dimension_numbers = #tpu.dot_dimension_numbers<[1], [0], [0], [1], [0, 0, 1, 1], [], []>} : vector<64x432xbf16>, vector<432x128xbf16>, vector<64x128xf32> -> vector<64x128xf32>
    %3 = arith.truncf %2 : vector<64x128xf32> to vector<64x128xbf16>
    %c0_3 = arith.constant 0 : index
    %c0_4 = arith.constant 0 : index
    %4 = vector.load %arg3[%c0_3, %c0_4] : memref<64x128xbf16, #tpu.memory_space<vmem>>, vector<64x128xbf16>
    tpu.vector_store %arg3[%c0_3, %c0_4], %3 {strides = array<i32>} : memref<64x128xbf16, #tpu.memory_space<vmem>>, vector<64x128xbf16>,
    %cst_5 = arith.constant dense<0.000000e+00> : vector<128xf32>
    %5 = vector.multi_reduction <add>, %2, %cst_5 [0] : vector<64x128xf32> to vector<128xf32>
    %6 = vector.shape_cast %5 : vector<128xf32> to vector<1x128xf32>
    %7 = arith.mulf %2, %2 : vector<64x128xf32>
    %cst_6 = arith.constant dense<0.000000e+00> : vector<128xf32>
    %8 = vector.multi_reduction <add>, %7, %cst_6 [0] : vector<64x128xf32> to vector<128xf32>
    %9 = vector.shape_cast %8 : vector<128xf32> to vector<1x128xf32>
    %10 = tpu.concatenate %6, %9 in 0 : vector<1x128xf32>, vector<1x128xf32> -> vector<2x128xf32>
    %11 = vector.shape_cast %10 : vector<2x128xf32> to vector<1x2x128xf32>
    %c0_7 = arith.constant 0 : index
    %c0_8 = arith.constant 0 : index
    %c0_9 = arith.constant 0 : index
    %12 = vector.load %arg4[%c0_7, %c0_8, %c0_9] : memref<1x2x128xf32, #tpu.memory_space<vmem>>, vector<1x2x128xf32>
    tpu.vector_store %arg4[%c0_7, %c0_8, %c0_9], %11 {strides = array<i32>} : memref<1x2x128xf32, #tpu.memory_space<vmem>>, vector<1x2x128xf32>,
    return
  }
  func.func @transform_0(%arg0: i32) -> (i32, i32) {
    %c0_i32 = arith.constant 0 : i32
    %c0_i32_0 = arith.constant 0 : i32
    return %arg0, %c0_i32 : i32, i32
  }
  func.func @transform_1(%arg0: i32) -> (i32, i32) {
    %c0_i32 = arith.constant 0 : i32
    %c0_i32_0 = arith.constant 0 : i32
    %c0_i32_1 = arith.constant 0 : i32
    return %c0_i32, %c0_i32_0 : i32, i32
  }
  func.func @transform_2(%arg0: i32) -> (i32, i32) {
    %c0_i32 = arith.constant 0 : i32
    %c0_i32_0 = arith.constant 0 : i32
    return %arg0, %c0_i32 : i32, i32
  }
  func.func @transform_3(%arg0: i32) -> (i32, i32, i32) {
    %c0_i32 = arith.constant 0 : i32
    %c0_i32_0 = arith.constant 0 : i32
    %c0_i32_1 = arith.constant 0 : i32
    return %arg0, %c0_i32, %c0_i32_0 : i32, i32, i32
  }
}

</mosaic_0001>

<llo_original>
// kernel: tpu_custom_call.1
$region0: #{tpu_custom_call.1}
  #allocation0 [shape = 'u32[]', space=smem, size = 0x4, offset = 0x4, fixed_abs, tag = 'smem constant byte address 0x4 - core index']
  #allocation1 [shape = 'u32[144,128]{1,0:T(1,128)}', space=vmem, size = 0x12000, scoped, tag = 'internal scratch']
  %s0 = inlined_call_operand.vmem [shape: bf16[256,432], index: 0, kind: input, shape index: {}]
  %s1 = inlined_call_operand.vmem [shape: bf16[432,128], index: 1, kind: input, shape index: {}]
  %s2 = inlined_call_operand.hbm [shape: bf16[256,128], index: 2, kind: output, shape index: {0}]
  %s3 = inlined_call_operand.hbm [shape: f32[4,2,128], index: 3, kind: output, shape index: {1}]
  %4 = xla_tuple %s2, %s3
  %s5 = sld [smem:[#allocation0]]
  $region49: #{tpu_custom_call.1} parent=0
    _
  %s7 = ssub.s32 1, %s5
  %s8 = scalar_select 0, %s7, %s5
  $region1: #{tpu_custom_call.1} parent=0
    #allocation2 [shape = 'u8[32768]{0}', space=vmem, size = 0x8000, scoped, tag = 'output window, operand 0']
    #allocation3 [shape = 's32[2]{0}', space=sflag, size = 0x8, scoped, tag = 'scoped memory for tpu_custom_call.1']
    #allocation4 [shape = 'u8[2048]{0}', space=vmem, size = 0x800, scoped, tag = 'output window, operand 1']
    #allocation5 [shape = 's32[2]{0}', space=sflag, size = 0x8, scoped, tag = 'scoped memory for tpu_custom_call.1']
    %9 = vsyncpa [#allocation3], 0
    %s10 = scalar_lea.sflag [#allocation3], 1
    %11 = vsyncpa %s10, 0
    %12 = vsyncpa [#allocation5], 0
    %s13 = scalar_lea.sflag [#allocation5], 1
    %14 = vsyncpa %s13, 0
    loop: start=0, step=1, limit=6
    $region2: #{tpu_custom_call.1} parent=1 // loop_pre_header
      _
    $region3: #{tpu_custom_call.1} parent=1 // loop_header
      %s16 = sphi 0, %s20
      %p17 = scmp.ge.s32.totalorder %s16, 6
      %s26 = sphi 0, %s28
      %s29 = sphi 0, %s26
      %s30 = sphi 0, %s29
      %s46 = sphi 0, %s30
      %s50 = sphi 0, %s50
      %s52 = sphi 0, %s50
      %s53 = sphi 0, %s52
      %s67 = sphi 0, %s53
      %s73 = sphi 0, %s75
      %s76 = sphi 0, %s73
      %s77 = sphi 0, %s76
      %s93 = sphi 0, %s77
      %s99 = sphi 0, %s101
      %s102 = sphi 0, %s99
      %s103 = sphi 0, %s102
      %s119 = sphi 0, %s103
    $region4: #{tpu_custom_call.1} parent=1 // loop_header_branch
      %19 = sbr.rel (%p17) target = $region8
    $region5: #{tpu_custom_call.1} parent=1 // loop_body
      %s21 = ssub.s32 %s16, 1
      %s22 = ssub.s32 %s16, 2
      %s23 = sadd.s32 %s16, 1
      %s24 = ssub.s32 %s16, %s23
      %p25 = scmp.eq.s32.totalorder %s24, 0
      %s27 = sadd.s32 %s26, 1
      %s28 = scalar_select %p25, %s26, %s27
      %p31 = pneg %p25
      %p32 = scmp.eq.s32.totalorder %s16, 3
      %p33 = por %p31, %p32
      %p34 = scmp.ne.s32.totalorder %s26, %s29
      %p35 = scmp.eq.s32.totalorder %s16, 0
      %p36 = por %p34, %p35
      %p37 = scmp.ne.s32.totalorder %s26, %s29
      %p38 = scmp.eq.s32.totalorder %s21, 3
      %p39 = por %p37, %p38
      %p40 = scmp.ne.s32.totalorder %s29, %s30
      %p41 = scmp.eq.s32.totalorder %s21, 0
      %p42 = por %p40, %p41
      %p43 = scmp.ne.s32.totalorder %s29, %s30
      %p44 = scmp.eq.s32.totalorder %s22, 3
      %p45 = por %p43, %p44
      %p47 = scmp.ne.s32.totalorder %s30, %s46
      %p48 = scmp.eq.s32.totalorder %s22, 0
      %p49 = por %p47, %p48
      %s51 = sadd.s32 %s50, 1
      %p54 = scmp.eq.s32.totalorder %s16, 3
      %p55 = scmp.ne.s32.totalorder %s50, %s52
      %p56 = scmp.eq.s32.totalorder %s16, 0
      %p57 = por %p55, %p56
      %p58 = scmp.ne.s32.totalorder %s50, %s52
      %p59 = scmp.eq.s32.totalorder %s21, 3
      %p60 = por %p58, %p59
      %p61 = scmp.ne.s32.totalorder %s52, %s53
      %p62 = scmp.eq.s32.totalorder %s21, 0
      %p63 = por %p61, %p62
      %p64 = scmp.ne.s32.totalorder %s52, %s53
      %p65 = scmp.eq.s32.totalorder %s22, 3
      %p66 = por %p64, %p65
      %p68 = scmp.ne.s32.totalorder %s53, %s67
      %p69 = scmp.eq.s32.totalorder %s22, 0
      %p70 = por %p68, %p69
      %s71 = ssub.s32 %s16, %s23
      %p72 = scmp.eq.s32.totalorder %s71, 0
      %s74 = sadd.s32 %s73, 1
      %s75 = scalar_select %p72, %s73, %s74
      %p78 = pneg %p72
      %p79 = scmp.eq.s32.totalorder %s16, 3
      %p80 = por %p78, %p79
      %p81 = scmp.ne.s32.totalorder %s73, %s76
      %p82 = scmp.eq.s32.totalorder %s16, 0
      %p83 = por %p81, %p82
      %p84 = scmp.ne.s32.totalorder %s73, %s76
      %p85 = scmp.eq.s32.totalorder %s21, 3
      %p86 = por %p84, %p85
      %p87 = scmp.ne.s32.totalorder %s76, %s77
      %p88 = scmp.eq.s32.totalorder %s21, 0
      %p89 = por %p87, %p88
      %p90 = scmp.ne.s32.totalorder %s76, %s77
      %p91 = scmp.eq.s32.totalorder %s22, 3
      %p92 = por %p90, %p91
      %p94 = scmp.ne.s32.totalorder %s77, %s93
      %p95 = scmp.eq.s32.totalorder %s22, 0
      %p96 = por %p94, %p95
      %s97 = ssub.s32 %s16, %s23
      %p98 = scmp.eq.s32.totalorder %s97, 0
      %s100 = sadd.s32 %s99, 1
      %s101 = scalar_select %p98, %s99, %s100
      %p104 = pneg %p98
      %p105 = scmp.eq.s32.totalorder %s16, 3
      %p106 = por %p104, %p105
      %p107 = scmp.ne.s32.totalorder %s99, %s102
      %p108 = scmp.eq.s32.totalorder %s16, 0
      %p109 = por %p107, %p108
      %p110 = scmp.ne.s32.totalorder %s99, %s102
      %p111 = scmp.eq.s32.totalorder %s21, 3
      %p112 = por %p110, %p111
      %p113 = scmp.ne.s32.totalorder %s102, %s103
      %p114 = scmp.eq.s32.totalorder %s21, 0
      %p115 = por %p113, %p114
      %p116 = scmp.ne.s32.totalorder %s102, %s103
      %p117 = scmp.eq.s32.totalorder %s22, 3
      %p118 = por %p116, %p117
      %p120 = scmp.ne.s32.totalorder %s103, %s119
      %p121 = scmp.eq.s32.totalorder %s22, 0
      %p122 = por %p120, %p121
      %p123 = scmp.le.s32.totalorder 1, %s16
      %p124 = scmp.lt.s32.totalorder %s16, 5
      %p125 = pnand %p123, %p124
      %p126 = pneg %p125
      // Predicated region
      $region9: #{tpu_custom_call.1} parent=5 // pred_check
        _
      $region10: #{tpu_custom_call.1} parent=5 // pred_check_branch
        %128 = sbr.rel (%p125) target = $region12
      $region11: #{tpu_custom_call.1} parent=5 // pred_region
        %s129 = ssub.s32 %s16, 1
        // Predicated region
        $region13: #{tpu_custom_call.1} parent=11 // pred_check
          %p130 = pneg %p63
        $region14: #{tpu_custom_call.1} parent=11 // pred_check_branch
          %132 = sbr.rel (%p130) target = $region16
        $region15: #{tpu_custom_call.1} parent=11 // pred_region
          _
        $region16: #{tpu_custom_call.1} parent=11 // pred_fallthru
          _
      $region12: #{tpu_custom_call.1} parent=5 // pred_fallthru
        _
      %p133 = scmp.lt.s32.totalorder %s16, 4
      // Predicated region
      $region17: #{tpu_custom_call.1} parent=5 // pred_check
        %p134 = pneg %p133
      $region18: #{tpu_custom_call.1} parent=5 // pred_check_branch
        %136 = sbr.rel (%p134) target = $region20
      $region19: #{tpu_custom_call.1} parent=5 // pred_region
        // Predicated region
        $region21: #{tpu_custom_call.1} parent=19 // pred_check
          %p137 = pneg %p36
        $region22: #{tpu_custom_call.1} parent=19 // pred_check_branch
          %139 = sbr.rel (%p137) target = $region24
        $region23: #{tpu_custom_call.1} parent=19 // pred_region
          %s140 = smul.u32 8, %s16
          %p141 = scmp.lt.s32.totalorder %s140, 31
          %s142 = scalar_select %p141, %s140, 31
          %s143 = smul.addr %s142, 4
          %s144 = smul.addr %s143, 4
          %s145 = scalar_lea.vmem %s0, %s144
          %s146 = smul.u32 8, %s16
        $region24: #{tpu_custom_call.1} parent=19 // pred_fallthru
          _
      $region20: #{tpu_custom_call.1} parent=5 // pred_fallthru
        _
      %p147 = scmp.le.s32.totalorder 1, %s16
      %p148 = scmp.lt.s32.totalorder %s16, 5
      %p149 = pnand %p147, %p148
      %p150 = pneg %p149
      // Predicated region
      $region25: #{tpu_custom_call.1} parent=5 // pred_check
        _
      $region26: #{tpu_custom_call.1} parent=5 // pred_check_branch
        %152 = sbr.rel (%p149) target = $region28
      $region27: #{tpu_custom_call.1} parent=5 // pred_region
        %s153 = ssub.s32 %s16, 1
        %s154 = smul.u32 8, %s21
        %p155 = scmp.lt.s32.totalorder %s154, 31
        %s156 = scalar_select %p155, %s154, 31
        %s157 = smul.addr %s156, 4
        %s158 = smul.addr %s157, 4
        %s159 = scalar_lea.vmem %s0, %s158
        %p160 = pneg %p42
        %p161 = pneg %p39
        %p162 = pneg %p63
        %p163 = pneg %p60
        %p164 = pneg %p89
        %p165 = pneg %p86
        %s166 = sand.u32 %s76, 1
        %s167 = scalar_lea.sflag [#allocation3], %s166
        %s168 = sand.u32 %s76, 1
        %s169 = smul.addr %s168, 32
        %s170 = scalar_lea.vmem [#allocation2], %s169
        %p171 = pneg %p115
        %p172 = pneg %p112
        %s173 = sand.u32 %s102, 1
        %s174 = scalar_lea.sflag [#allocation5], %s173
        %s175 = sand.u32 %s102, 1
        %s176 = smul.addr %s175, 2
        %s177 = scalar_lea.vmem [#allocation4], %s176
        %s178 = smul.u32 8, %s21
        %p179 = scmp.lt.s32.totalorder %s178, 31
        %s180 = scalar_select %p179, %s178, 31
        %s181 = smul.addr %s180, 4
        %s182 = smul.addr %s181, 4
        %s183 = scalar_lea.vmem %s0, %s182
        %s184 = smul.u32 8, %s21
        %s185 = smul.u32 8, %s21
        %v187 = vld [vmem:[%s183] sm:$0xff]
        %v188 = vld [vmem:[%s183 + $0x8] sm:$0xff]
        %v189 = vld [vmem:[%s183 + $0x10] sm:$0xff]
        %v190 = vld [vmem:[%s183 + $0x18] sm:$0xff]
        %v191 = vld [vmem:[%s183 + $0x20] sm:$0xff]
        %v192 = vld [vmem:[%s183 + $0x28] sm:$0xff]
        %v193 = vld [vmem:[%s183 + $0x30] sm:$0xff]
        %v194 = vld [vmem:[%s183 + $0x38] sm:$0xff]
        %v195 = vld [vmem:[%s183 + $0x40] sm:$0xff]
        %v196 = vld [vmem:[%s183 + $0x48] sm:$0xff]
        %v197 = vld [vmem:[%s183 + $0x50] sm:$0xff]
        %v198 = vld [vmem:[%s183 + $0x58] sm:$0xff]
        %v199 = vld [vmem:[%s183 + $0x60] sm:$0xff]
        %v200 = vld [vmem:[%s183 + $0x68] sm:$0xff]
        %v201 = vld [vmem:[%s183 + $0x70] sm:$0xff]
        %v202 = vld [vmem:[%s183 + $0x78] sm:$0xff]
        %v203 = vld [vmem:[%s1] sm:$0xf]
        %v204 = vld [vmem:[%s1 + $0x4] sm:$0xf]
        %v205 = vld [vmem:[%s1 + $0x8] sm:$0xf]
        %v206 = vld [vmem:[%s1 + $0xc] sm:$0xf]
        %v207 = vld [vmem:[%s1 + $0x10] sm:$0xf]
        %v208 = vld [vmem:[%s1 + $0x14] sm:$0xf]
        %v209 = vld [vmem:[%s1 + $0x18] sm:$0xf]
        %v210 = vld [vmem:[%s1 + $0x1c] sm:$0xf]
        %v211 = vld [vmem:[%s1 + $0x20] sm:$0xf]
        %v212 = vld [vmem:[%s1 + $0x24] sm:$0xf]
        %v213 = vld [vmem:[%s1 + $0x28] sm:$0xf]
        %v214 = vld [vmem:[%s1 + $0x2c] sm:$0xf]
        %v215 = vld [vmem:[%s1 + $0x30] sm:$0xf]
        %v216 = vld [vmem:[%s1 + $0x34] sm:$0xf]
        %v217 = vld [vmem:[%s1 + $0x38] sm:$0xf]
        %v218 = vld [vmem:[%s1 + $0x3c] sm:$0xf]
        %v219 = vld [vmem:[%s1 + $0x40] sm:$0xf]
        %v220 = vld [vmem:[%s1 + $0x44] sm:$0xf]
        %v221 = vld [vmem:[%s1 + $0x48] sm:$0xf]
        %v222 = vld [vmem:[%s1 + $0x4c] sm:$0xf]
        %v223 = vld [vmem:[%s1 + $0x50] sm:$0xf]
        %v224 = vld [vmem:[%s1 + $0x54] sm:$0xf]
        %v225 = vld [vmem:[%s1 + $0x58] sm:$0xf]
        %v226 = vld [vmem:[%s1 + $0x5c] sm:$0xf]
        %v227 = vld [vmem:[%s1 + $0x60] sm:$0xf]
        %v228 = vld [vmem:[%s1 + $0x64] sm:$0xf]
        %v229 = vld [vmem:[%s1 + $0x68] sm:$0xf]
        %v230 = vld [vmem:[%s1 + $0x6c] sm:$0xf]
        %v231 = vld [vmem:[%s1 + $0x70] sm:$0xf]
        %v232 = vld [vmem:[%s1 + $0x74] sm:$0xf]
        %v233 = vld [vmem:[%s1 + $0x78] sm:$0xf]
        %v234 = vld [vmem:[%s1 + $0x7c] sm:$0xf]
        %v235 = vld [vmem:[%s1 + $0x80] sm:$0xf]
        %v236 = vld [vmem:[%s1 + $0x84] sm:$0xf]
        %v237 = vld [vmem:[%s1 + $0x88] sm:$0xf]
        %v238 = vld [vmem:[%s1 + $0x8c] sm:$0xf]
        %v239 = vld [vmem:[%s1 + $0x90] sm:$0xf]
        %v240 = vld [vmem:[%s1 + $0x94] sm:$0xf]
        %v241 = vld [vmem:[%s1 + $0x98] sm:$0xf]
        %v242 = vld [vmem:[%s1 + $0x9c] sm:$0xf]
        %v243 = vld [vmem:[%s1 + $0xa0] sm:$0xf]
        %v244 = vld [vmem:[%s1 + $0xa4] sm:$0xf]
        %v245 = vld [vmem:[%s1 + $0xa8] sm:$0xf]
        %v246 = vld [vmem:[%s1 + $0xac] sm:$0xf]
        %v247 = vld [vmem:[%s1 + $0xb0] sm:$0xf]
        %v248 = vld [vmem:[%s1 + $0xb4] sm:$0xf]
        %v249 = vld [vmem:[%s1 + $0xb8] sm:$0xf]
        %v250 = vld [vmem:[%s1 + $0xbc] sm:$0xf]
        %v251 = vld [vmem:[%s1 + $0xc0] sm:$0xf]
        %v252 = vld [vmem:[%s1 + $0xc4] sm:$0xf]
        %v253 = vld [vmem:[%s1 + $0xc8] sm:$0xf]
        %v254 = vld [vmem:[%s1 + $0xcc] sm:$0xf]
        %v255 = vld [vmem:[%s1 + $0xd0] sm:$0xf]
        %v256 = vld [vmem:[%s1 + $0xd4] sm:$0xf]
        %v273 = vunpack.c.l.b16 %v187
        %v274 = vunpack.c.h.b16 %v187
        %v275 = vunpack.c.l.b16 %v188
        %v276 = vunpack.c.h.b16 %v188
        %v277 = vunpack.c.l.b16 %v189
        %v278 = vunpack.c.h.b16 %v189
        %v279 = vunpack.c.l.b16 %v190
        %v280 = vunpack.c.h.b16 %v190
        %v281 = vunpack.c.l.b16 %v191
        %v282 = vunpack.c.h.b16 %v191
        %v283 = vunpack.c.l.b16 %v192
        %v284 = vunpack.c.h.b16 %v192
        %v285 = vunpack.c.l.b16 %v193
        %v286 = vunpack.c.h.b16 %v193
        %v287 = vunpack.c.l.b16 %v194
        %v288 = vunpack.c.h.b16 %v194
        %v289 = vunpack.c.l.b16 %v195
        %v290 = vunpack.c.h.b16 %v195
        %v291 = vunpack.c.l.b16 %v196
        %v292 = vunpack.c.h.b16 %v196
        %v293 = vunpack.c.l.b16 %v197
        %v294 = vunpack.c.h.b16 %v197
        %v295 = vunpack.c.l.b16 %v198
        %v296 = vunpack.c.h.b16 %v198
        %v297 = vunpack.c.l.b16 %v199
        %v298 = vunpack.c.h.b16 %v199
        %v299 = vunpack.c.l.b16 %v200
        %v300 = vunpack.c.h.b16 %v200
        %v301 = vunpack.c.l.b16 %v201
        %v302 = vunpack.c.h.b16 %v201
        %v303 = vunpack.c.l.b16 %v202
        %v304 = vunpack.c.h.b16 %v202
        %v305 = vpack.c.b16 %v277, %v273
        %v306 = vpack.c.b16 %v278, %v274
        %v307 = vpack.c.b16 %v279, %v275
        %v308 = vpack.c.b16 %v280, %v276
        %v309 = vpack.c.b16 %v285, %v281
        %v310 = vpack.c.b16 %v286, %v282
        %v311 = vpack.c.b16 %v287, %v283
        %v312 = vpack.c.b16 %v288, %v284
        %v313 = vpack.c.b16 %v293, %v289
        %v314 = vpack.c.b16 %v294, %v290
        %v315 = vpack.c.b16 %v295, %v291
        %v316 = vpack.c.b16 %v296, %v292
        %v317 = vpack.c.b16 %v301, %v297
        %v318 = vpack.c.b16 %v302, %v298
        %v319 = vpack.c.b16 %v303, %v299
        %v320 = vpack.c.b16 %v304, %v300
        %v387 = vunpack.c.l.b16 %v203
        %v388 = vunpack.c.l.b16 %v204
        %v389 = vunpack.c.l.b16 %v205
        %v390 = vunpack.c.l.b16 %v206
        %v391 = vunpack.c.l.b16 %v207
        %v392 = vunpack.c.l.b16 %v208
        %v393 = vunpack.c.l.b16 %v209
        %v394 = vunpack.c.l.b16 %v210
        %v395 = vunpack.c.l.b16 %v211
        %v396 = vunpack.c.l.b16 %v212
        %v397 = vunpack.c.l.b16 %v213
        %v398 = vunpack.c.l.b16 %v214
        %v399 = vunpack.c.l.b16 %v215
        %v400 = vunpack.c.l.b16 %v216
        %v401 = vunpack.c.l.b16 %v217
        %v402 = vunpack.c.l.b16 %v218
        %v403 = vunpack.c.l.b16 %v219
        %v404 = vunpack.c.l.b16 %v220
        %v405 = vunpack.c.l.b16 %v221
        %v406 = vunpack.c.l.b16 %v222
        %v407 = vunpack.c.l.b16 %v223
        %v408 = vunpack.c.l.b16 %v224
        %v409 = vunpack.c.l.b16 %v225
        %v410 = vunpack.c.l.b16 %v226
        %v411 = vunpack.c.l.b16 %v227
        %v412 = vunpack.c.l.b16 %v228
        %v413 = vunpack.c.l.b16 %v229
        %v414 = vunpack.c.l.b16 %v230
        %v415 = vunpack.c.l.b16 %v231
        %v416 = vunpack.c.l.b16 %v232
        %v417 = vunpack.c.l.b16 %v233
        %v418 = vunpack.c.l.b16 %v234
        %v419 = vunpack.c.l.b16 %v235
        %v420 = vunpack.c.l.b16 %v236
        %v421 = vunpack.c.l.b16 %v237
        %v422 = vunpack.c.l.b16 %v238
        %v423 = vunpack.c.l.b16 %v239
        %v424 = vunpack.c.l.b16 %v240
        %v425 = vunpack.c.l.b16 %v241
        %v426 = vunpack.c.l.b16 %v242
        %v427 = vunpack.c.l.b16 %v243
        %v428 = vunpack.c.l.b16 %v244
        %v429 = vunpack.c.l.b16 %v245
        %v430 = vunpack.c.l.b16 %v246
        %v431 = vunpack.c.l.b16 %v247
        %v432 = vunpack.c.l.b16 %v248
        %v433 = vunpack.c.l.b16 %v249
        %v434 = vunpack.c.l.b16 %v250
        %v435 = vunpack.c.l.b16 %v251
        %v436 = vunpack.c.l.b16 %v252
        %v437 = vunpack.c.l.b16 %v253
        %v438 = vunpack.c.l.b16 %v254
        %v439 = vunpack.c.l.b16 %v255
        %v440 = vunpack.c.l.b16 %v256
        %v441 = vpack.c.b16 %v388, %v387
        %v442 = vpack.c.b16 %v390, %v389
        %v443 = vpack.c.b16 %v392, %v391
        %v444 = vpack.c.b16 %v394, %v393
        %v445 = vpack.c.b16 %v396, %v395
        %v446 = vpack.c.b16 %v398, %v397
        %v447 = vpack.c.b16 %v400, %v399
        %v448 = vpack.c.b16 %v402, %v401
        %v449 = vpack.c.b16 %v404, %v403
        %v450 = vpack.c.b16 %v406, %v405
        %v451 = vpack.c.b16 %v408, %v407
        %v452 = vpack.c.b16 %v410, %v409
        %v453 = vpack.c.b16 %v412, %v411
        %v454 = vpack.c.b16 %v414, %v413
        %v455 = vpack.c.b16 %v416, %v415
        %v456 = vpack.c.b16 %v418, %v417
        %v457 = vpack.c.b16 %v420, %v419
        %v458 = vpack.c.b16 %v422, %v421
        %v459 = vpack.c.b16 %v424, %v423
        %v460 = vpack.c.b16 %v426, %v425
        %v461 = vpack.c.b16 %v428, %v427
        %v462 = vpack.c.b16 %v430, %v429
        %v463 = vpack.c.b16 %v432, %v431
        %v464 = vpack.c.b16 %v434, %v433
        %v465 = vpack.c.b16 %v436, %v435
        %v466 = vpack.c.b16 %v438, %v437
        %v467 = vpack.c.b16 %v440, %v439
        %vm495 = vcmask 392192
        %v497 = vsel %vm495, %v308, 0
        %v500 = vsel %vm495, %v312, 0
        %v503 = vsel %vm495, %v316, 0
        %v506 = vsel %vm495, %v320, 0
        %508 = vmatprep.subr.bf16.mxu0 0
        %509 = vmatpush1.bf16.msra.mxu0 %v448
        %510 = vmatprep.subr.bf16.mxu0 0
        %511 = vmatpush1.bf16.msra.mxu0 %v447
        %512 = vmatprep.subr.bf16.mxu0 0
        %513 = vmatpush1.bf16.msra.mxu0 %v446
        %514 = vmatprep.subr.bf16.mxu0 0
        %515 = vmatpush1.bf16.msra.mxu0 %v445
        %516 = vmatprep.subr.bf16.mxu0 0
        %517 = vmatpush1.bf16.msra.mxu0 %v444
        %518 = vmatprep.subr.bf16.mxu0 0
        %519 = vmatpush1.bf16.msra.mxu0 %v443
        %520 = vmatprep.subr.bf16.mxu0 0
        %521 = vmatpush1.bf16.msra.mxu0 %v442
        %522 = vmatprep.subr.bf16.mxu0 0
        %523 = vmatpush1.bf16.msra.mxu0 %v441
        %524 = vmatprep.subr.bf16.mxu0 0
        %525 = vmatpush2.bf16.msra.mxu0 %v456
        %526 = vmatprep.subr.bf16.mxu0 0
        %527 = vmatpush2.bf16.msra.mxu0 %v455
        %528 = vmatprep.subr.bf16.mxu0 0
        %529 = vmatpush2.bf16.msra.mxu0 %v454
        %530 = vmatprep.subr.bf16.mxu0 0
        %531 = vmatpush2.bf16.msra.mxu0 %v453
        %532 = vmatprep.subr.bf16.mxu0 0
        %533 = vmatpush2.bf16.msra.mxu0 %v452
        %534 = vmatprep.subr.bf16.mxu0 0
        %535 = vmatpush2.bf16.msra.mxu0 %v451
        %536 = vmatprep.subr.bf16.mxu0 0
        %537 = vmatpush2.bf16.msra.mxu0 %v450
        %538 = vmatprep.subr.bf16.mxu0 0
        %539 = vmatpush2.bf16.msra.mxu0 %v449
        %540 = vmatprep.mubr.bf16.mxu0 %v306
        %541 = vmatmul.mubr.bf16.gmra.mxu0 %v305
        %v542 = vpop.f32.mrf.mxu0
        %v543 = vadd.f32 0.0, %v542
        %v544 = vpop.f32.mrf.mxu0
        %v545 = vpop.f32.mrf.mxu0
        %v546 = vadd.f32 0.0, %v545
        %v547 = vpop.f32.mrf.mxu0
        %548 = vmatprep.mubr.bf16.mxu0 %v310
        %549 = vmatmul.mubr.bf16.gmra.mxu0 %v309
        %v550 = vpop.f32.mrf.mxu0
        %v551 = vadd.f32 0.0, %v550
        %v552 = vpop.f32.mrf.mxu0
        %v553 = vpop.f32.mrf.mxu0
        %v554 = vadd.f32 0.0, %v553
        %v555 = vpop.f32.mrf.mxu0
        %556 = vmatprep.mubr.bf16.mxu0 %v314
        %557 = vmatmul.mubr.bf16.gmra.mxu0 %v313
        %v558 = vpop.f32.mrf.mxu0
        %v559 = vadd.f32 0.0, %v558
        %v560 = vpop.f32.mrf.mxu0
        %v561 = vpop.f32.mrf.mxu0
        %v562 = vadd.f32 0.0, %v561
        %v563 = vpop.f32.mrf.mxu0
        %564 = vmatprep.mubr.bf16.mxu0 %v318
        %565 = vmatmul.mubr.bf16.gmra.mxu0 %v317
        %v566 = vpop.f32.mrf.mxu0
        %v567 = vadd.f32 0.0, %v566
        %v568 = vpop.f32.mrf.mxu0
        %v569 = vpop.f32.mrf.mxu0
        %v570 = vadd.f32 0.0, %v569
        %v571 = vpop.f32.mrf.mxu0
        %572 = vdwg.mxu0
        %573 = vmatprep.subr.bf16.mxu0 0
        %574 = vmatpush1.bf16.msra.mxu0 %v464
        %575 = vmatprep.subr.bf16.mxu0 0
        %576 = vmatpush1.bf16.msra.mxu0 %v463
        %577 = vmatprep.subr.bf16.mxu0 0
        %578 = vmatpush1.bf16.msra.mxu0 %v462
        %579 = vmatprep.subr.bf16.mxu0 0
        %580 = vmatpush1.bf16.msra.mxu0 %v461
        %581 = vmatprep.subr.bf16.mxu0 0
        %582 = vmatpush1.bf16.msra.mxu0 %v460
        %583 = vmatprep.subr.bf16.mxu0 0
        %584 = vmatpush1.bf16.msra.mxu0 %v459
        %585 = vmatprep.subr.bf16.mxu0 0
        %586 = vmatpush1.bf16.msra.mxu0 %v458
        %587 = vmatprep.subr.bf16.mxu0 0
        %588 = vmatpush1.bf16.msra.mxu0 %v457
        %589 = vmatprep.subr.bf16.mxu0 0
        %590 = vmatpush2.bf16.msra.mxu0 0
        %591 = vmatprep.subr.bf16.mxu0 0
        %592 = vmatpush2.bf16.msra.mxu0 0
        %593 = vmatprep.subr.bf16.mxu0 0
        %594 = vmatpush2.bf16.msra.mxu0 0
        %595 = vmatprep.subr.bf16.mxu0 0
        %596 = vmatpush2.bf16.msra.mxu0 0
        %597 = vmatprep.subr.bf16.mxu0 0
        %598 = vmatpush2.bf16.msra.mxu0 0
        %599 = vmatprep.subr.bf16.mxu0 0
        %600 = vmatpush2.bf16.msra.mxu0 %v467
        %601 = vmatprep.subr.bf16.mxu0 0
        %602 = vmatpush2.bf16.msra.mxu0 %v466
        %603 = vmatprep.subr.bf16.mxu0 0
        %604 = vmatpush2.bf16.msra.mxu0 %v465
        %605 = vmatprep.mubr.bf16.mxu0 %v497
        %606 = vmatmul.mubr.bf16.gmra.mxu0 %v307
        %v607 = vpop.f32.mrf.mxu0
        %v608 = vadd.f32 %v543, %v607
        %v609 = vpop.f32.mrf.mxu0
        %v610 = vpop.f32.mrf.mxu0
        %v611 = vadd.f32 %v546, %v610
        %v612 = vpop.f32.mrf.mxu0
        %613 = vmatprep.mubr.bf16.mxu0 %v500
        %614 = vmatmul.mubr.bf16.gmra.mxu0 %v311
        %v615 = vpop.f32.mrf.mxu0
        %v616 = vadd.f32 %v551, %v615
        %v617 = vpop.f32.mrf.mxu0
        %v618 = vpop.f32.mrf.mxu0
        %v619 = vadd.f32 %v554, %v618
        %v620 = vpop.f32.mrf.mxu0
        %621 = vmatprep.mubr.bf16.mxu0 %v503
        %622 = vmatmul.mubr.bf16.gmra.mxu0 %v315
        %v623 = vpop.f32.mrf.mxu0
        %v624 = vadd.f32 %v559, %v623
        %v625 = vpop.f32.mrf.mxu0
        %v626 = vpop.f32.mrf.mxu0
        %v627 = vadd.f32 %v562, %v626
        %v628 = vpop.f32.mrf.mxu0
        %629 = vmatprep.mubr.bf16.mxu0 %v506
        %630 = vmatmul.mubr.bf16.gmra.mxu0 %v319
        %v631 = vpop.f32.mrf.mxu0
        %v632 = vadd.f32 %v567, %v631
        %v633 = vpop.f32.mrf.mxu0
        %v634 = vpop.f32.mrf.mxu0
        %v635 = vadd.f32 %v570, %v634
        %v636 = vpop.f32.mrf.mxu0
        %637 = vdwg.mxu0
        %v638 = vpack.c.bf16 %v611, %v608
        %v639 = vpack.c.bf16 %v619, %v616
        %v640 = vpack.c.bf16 %v627, %v624
        %v641 = vpack.c.bf16 %v635, %v632
        %v646 = vunpack.c.l.b16 %v638
        %v647 = vunpack.c.h.b16 %v638
        %v648 = vunpack.c.l.b16 %v639
        %v649 = vunpack.c.h.b16 %v639
        %v650 = vunpack.c.l.b16 %v640
        %v651 = vunpack.c.h.b16 %v640
        %v652 = vunpack.c.l.b16 %v641
        %v653 = vunpack.c.h.b16 %v641
        %v654 = vpack.c.b16 %v646, %v646
        %v655 = vpack.c.b16 %v647, %v647
        %v656 = vpack.c.b16 %v648, %v648
        %v657 = vpack.c.b16 %v649, %v649
        %v658 = vpack.c.b16 %v650, %v650
        %v659 = vpack.c.b16 %v651, %v651
        %v660 = vpack.c.b16 %v652, %v652
        %v661 = vpack.c.b16 %v653, %v653
        %670 = vst [vmem:[%s170] sm:$0xf] %v654
        %671 = vst [vmem:[%s170 + $0x4] sm:$0xf] %v655
        %672 = vst [vmem:[%s170 + $0x8] sm:$0xf] %v656
        %673 = vst [vmem:[%s170 + $0xc] sm:$0xf] %v657
        %674 = vst [vmem:[%s170 + $0x10] sm:$0xf] %v658
        %675 = vst [vmem:[%s170 + $0x14] sm:$0xf] %v659
        %676 = vst [vmem:[%s170 + $0x18] sm:$0xf] %v660
        %677 = vst [vmem:[%s170 + $0x1c] sm:$0xf] %v661
        %v678 = vadd.f32 %v608, %v611
        %v679 = vadd.f32 %v678, %v616
        %v680 = vadd.f32 %v679, %v619
        %v681 = vadd.f32 %v680, %v624
        %v682 = vadd.f32 %v681, %v627
        %v683 = vadd.f32 %v682, %v632
        %v684 = vadd.f32 %v683, %v635
        %v685 = vrot.slane %v684, 4
        %v686 = vadd.f32 %v684, %v685
        %v687 = vrot.slane %v686, 2
        %v688 = vadd.f32 %v686, %v687
        %v689 = vrot.slane %v688, 1
        %v690 = vadd.f32 %v688, %v689
        %v691 = vmul.f32 %v608, %v608
        %v692 = vmul.f32 %v611, %v611
        %v693 = vmul.f32 %v616, %v616
        %v694 = vmul.f32 %v619, %v619
        %v695 = vmul.f32 %v624, %v624
        %v696 = vmul.f32 %v627, %v627
        %v697 = vmul.f32 %v632, %v632
        %v698 = vmul.f32 %v635, %v635
        %v699 = vadd.f32 %v691, %v692
        %v700 = vadd.f32 %v699, %v693
        %v701 = vadd.f32 %v700, %v694
        %v702 = vadd.f32 %v701, %v695
        %v703 = vadd.f32 %v702, %v696
        %v704 = vadd.f32 %v703, %v697
        %v705 = vadd.f32 %v704, %v698
        %v706 = vrot.slane %v705, 4
        %v707 = vadd.f32 %v705, %v706
        %v708 = vrot.slane %v707, 2
        %v709 = vadd.f32 %v707, %v708
        %v710 = vrot.slane %v709, 1
        %v711 = vadd.f32 %v709, %v710
        %vm712 = vcmask 1040384
        %v713 = vsel %vm712, %v690, %v711
        %714 = vst [vmem:[%s177] sm:$0x3] %v713
        %s715 = sand.u32 %s76, 1
        %s716 = scalar_lea.sflag [#allocation3], %s715
        %s717 = sand.u32 %s76, 1
        %s718 = smul.addr %s717, 32
        %s719 = scalar_lea.vmem [#allocation2], %s718
        %s720 = sand.u32 %s102, 1
        %s721 = scalar_lea.sflag [#allocation5], %s720
        %s722 = sand.u32 %s102, 1
        %s723 = smul.addr %s722, 2
        %s724 = scalar_lea.vmem [#allocation4], %s723
        // Predicated region
        $region29: #{tpu_custom_call.1} parent=27 // pred_check
          %p725 = pneg %p86
        $region30: #{tpu_custom_call.1} parent=27 // pred_check_branch
          %727 = sbr.rel (%p725) target = $region32
        $region31: #{tpu_custom_call.1} parent=27 // pred_region
          %s728 = smul.u32 8, %s21
          %s730 = ssub.s32 512, 512
          %731 = vsyncadd %s716, %s730
          %s732 = smul.addr %s728, 64
          %s733 = scalar_lea.hbm %s2, %s732
          %s734 = sshll.u32 %s719, 4
          %s735 = int_to_ptr.vmem [resolvable:$true] %s734
          %740 = dma.vmem_to_hbm [thread:$0]  %s735, 512, %s733, %s716, 64, 64, 4
        $region32: #{tpu_custom_call.1} parent=27 // pred_fallthru
          _
        // Predicated region
        $region33: #{tpu_custom_call.1} parent=27 // pred_check
          %p741 = pneg %p112
        $region34: #{tpu_custom_call.1} parent=27 // pred_check_branch
          %743 = sbr.rel (%p741) target = $region36
        $region35: #{tpu_custom_call.1} parent=27 // pred_region
          %s745 = ssub.s32 32, 32
          %746 = vsyncadd %s721, %s745
          %s747 = smul.addr %s21, 32
          %s748 = scalar_lea.hbm %s3, %s747
          %s750 = sshll.u32 %s724, 4
          %s751 = int_to_ptr.vmem [resolvable:$true] %s750
          %753 = dma.vmem_to_hbm [thread:$0]  %s751, 32, %s748, %s721
        $region36: #{tpu_custom_call.1} parent=27 // pred_fallthru
          _
      $region28: #{tpu_custom_call.1} parent=5 // pred_fallthru
        _
      %p754 = scmp.le.s32.totalorder 2, %s16
      // Predicated region
      $region37: #{tpu_custom_call.1} parent=5 // pred_check
        %p755 = pneg %p754
      $region38: #{tpu_custom_call.1} parent=5 // pred_check_branch
        %757 = sbr.rel (%p755) target = $region40
      $region39: #{tpu_custom_call.1} parent=5 // pred_region
        %s758 = ssub.s32 %s16, 2
        // Predicated region
        $region41: #{tpu_custom_call.1} parent=39 // pred_check
          %p759 = pneg %p92
        $region42: #{tpu_custom_call.1} parent=39 // pred_check_branch
          %761 = sbr.rel (%p759) target = $region44
        $region43: #{tpu_custom_call.1} parent=39 // pred_region
          %s762 = sand.u32 %s77, 1
          %s763 = scalar_lea.sflag [#allocation3], %s762
          %s764 = sand.u32 %s77, 1
          %s765 = smul.addr %s764, 32
          %s766 = scalar_lea.vmem [#allocation2], %s765
          %767 = dma.done %s763, 512
        $region44: #{tpu_custom_call.1} parent=39 // pred_fallthru
          _
        // Predicated region
        $region45: #{tpu_custom_call.1} parent=39 // pred_check
          %p768 = pneg %p118
        $region46: #{tpu_custom_call.1} parent=39 // pred_check_branch
          %770 = sbr.rel (%p768) target = $region48
        $region47: #{tpu_custom_call.1} parent=39 // pred_region
          %s771 = sand.u32 %s103, 1
          %s772 = scalar_lea.sflag [#allocation5], %s771
          %s773 = sand.u32 %s103, 1
          %s774 = smul.addr %s773, 2
          %s775 = scalar_lea.vmem [#allocation4], %s774
          %776 = dma.done %s772, 32
        $region48: #{tpu_custom_call.1} parent=39 // pred_fallthru
          _
      $region40: #{tpu_custom_call.1} parent=5 // pred_fallthru
        _
    $region6: #{tpu_custom_call.1} parent=1 // loop_footer
      %s20 = sadd.s32 1, %s16
    $region7: #{tpu_custom_call.1} parent=1 // loop_footer_branch
      %15 = sbr.rel target = $region3
    $region8: #{tpu_custom_call.1} parent=1 // loop_exit
      _
    %777 = vsyncpa [#allocation3], 1
    %s778 = scalar_lea.sflag [#allocation3], 1
    %779 = vsyncpa %s778, 1
    %780 = vsyncpa [#allocation5], 1
    %s781 = scalar_lea.sflag [#allocation5], 1
    %782 = vsyncpa %s781, 1

</llo_original>
